<compile_context>
chip_gen: v7x
topology: tpu7x:2x2x1
jax: 0.10.0
libtpu: 0.0.40
codegen_flags: <defaults>
</compile_context>

<pallas_src>
import jax
import jax.numpy as jnp
from jax.experimental import pallas as pl
from jax.experimental.pallas import tpu as pltpu


def emotion_kernel(x_ref, w_ref, b_ref, o_ref):
    # x_ref: (TB, C, HW)  activations (bf16/f32), NCHW with spatial flattened
    # w_ref: (C, K)  f32   classifier weight, pre-scaled by 1/(H*W)
    # b_ref: (1, K)  f32   classifier bias
    # o_ref: (TB, K) f32   softmax(dim=1) probabilities
    #
    # Global average pool fused with the head: spatial SUM over the lane (HW)
    # axis with f32 accumulation (no full-tile f32 copy); the 1/(H*W) scale is
    # folded into w, then the MXU contracts over channels.
    pooled = jnp.sum(x_ref[...], axis=-1, dtype=jnp.float32)        # (TB, C)
    logits = jnp.dot(pooled, w_ref[...],
                     preferred_element_type=jnp.float32)            # (TB, K)
    logits = logits + b_ref[...]

    # Numerically-stable softmax over dim=1 (classes) == nn.Softmax(dim=1).
    # Exact division: denom is only (TB, 1), so approx reciprocal buys nothing.
    m = jnp.max(logits, axis=1, keepdims=True)
    e = jnp.exp(logits - m)
    o_ref[...] = e / jnp.sum(e, axis=1, keepdims=True)


def _round_up(x, m):
    return (x + m - 1) // m * m


def _vmem_limit_bytes():
    """Scoped VMEM limit, generation-aware (v5e/v6e: 128 MiB, v7x per-TC: 64 MiB)."""
    try:
        cap = int(pltpu.get_tpu_info().vmem_capacity_bytes)
    except Exception:
        cap = 64 << 20            # conservative fallback = smallest (v7x per-TC)
    return max(cap - (8 << 20), 32 << 20)   # leave compiler headroom


def _choose_batch_tile(B, C, HW, act_itemsize, K, vmem_limit):
    """Largest batch tile whose full VMEM working set fits the budget.

    Counts 2x double-buffered input tiles (with lane/sublane padding), the
    double-buffered weight/bias/output blocks, and the (TB, C) f32 pooled
    intermediate — not just the input tiles.
    """
    c_pad = _round_up(C, 8)
    hw_pad = _round_up(HW, 128)
    k_pad = _round_up(K, 128)
    fixed = 2 * c_pad * k_pad * 4 + 2 * 8 * k_pad * 4         # w + b blocks (dbuf)
    per_row = (2 * c_pad * hw_pad * act_itemsize              # 2x input buffers
               + 2 * k_pad * 4                                # output block (dbuf)
               + c_pad * 4)                                   # pooled intermediate
    budget = int(vmem_limit * 0.8) - fixed
    tb = max(1, budget // per_row)
    if tb >= B:
        return B                      # whole batch resident: single grid step
    # Output block (TB, K): TB is a sublane dim -> keep it a multiple of 8.
    # (Best effort: never below 8 even if the budget is tighter.)
    return max(8, (tb // 8) * 8)


def _dimension_semantics():
    """CORE_PARALLEL splits the grid across v7x's 2 TensorCores; the plain
    "parallel" string is the safe default on single-TC chips."""
    try:
        kind = jax.devices()[0].device_kind.lower()
    except Exception:
        kind = ""
    if "v7" in kind:
        return (getattr(pltpu, "CORE_PARALLEL", "parallel"),)
    return ("parallel",)


def emotion_model_forward(x_nchw, w, b, *, activation_dtype=jnp.bfloat16):
    """x_nchw: (B, C, H, W); w: (C, K); b: (K,).  Returns (B, K) f32 probs.

    Activations default to bf16 (f32 accumulation inside the kernel): the
    kernel is HBM-bandwidth bound on the activation read.
    TODO(synk): in a real pipeline the backbone should emit bf16 directly so
    this cast fuses with the producer instead of being a separate HBM pass.
    """
    B, C, H, W = x_nchw.shape
    HW = H * W
    K = w.shape[1]

    # Contiguous (free) reshape only — no NCHW->NHWC transpose round trip.
    x = x_nchw.reshape(B, C, HW)
    if activation_dtype is not None and x.dtype != activation_dtype:
        x = x.astype(activation_dtype)

    # Fold the 1/(H*W) average-pool scale into the (tiny) weight, host-side.
    w_scaled = w.astype(jnp.float32) / float(HW)
    b2d = b.reshape(1, K).astype(jnp.float32)

    vmem_limit = _vmem_limit_bytes()
    tb = _choose_batch_tile(B, C, HW, jnp.dtype(x.dtype).itemsize, K, vmem_limit)
    grid = (pl.cdiv(B, tb),)
    # NOTE: if B % tb != 0 the last block's padded rows run through exp();
    # softmax is row-wise so valid rows are never contaminated.

    return pl.pallas_call(
        emotion_kernel,
        out_shape=jax.ShapeDtypeStruct((B, K), jnp.float32),
        grid=grid,
        in_specs=[
            pl.BlockSpec((tb, C, HW), lambda i: (i, 0, 0)),
            pl.BlockSpec((C, K), lambda i: (0, 0)),
            pl.BlockSpec((1, K), lambda i: (0, 0)),
        ],
        out_specs=pl.BlockSpec((tb, K), lambda i: (i, 0)),
        compiler_params=pltpu.CompilerParams(
            dimension_semantics=_dimension_semantics(),
            vmem_limit_bytes=vmem_limit,
        ),
    )(x, w_scaled, b2d)


if __name__ == "__main__":
    # Small shapes consistent with the module's NCHW forward.
    B, C, H, W = 2, 4, 16, 16
    NUM_CLASSES = 8  # e.g. 8 emotion classes

    key = jax.random.PRNGKey(0)
    kx, kw, kb = jax.random.split(key, 3)

    x = jax.random.normal(kx, (B, C, H, W), dtype=jnp.float32)
    # Deterministic synthetic parameters for the stand-in backbone head.
    w = jax.random.normal(kw, (C, NUM_CLASSES), dtype=jnp.float32) * 0.1
    b = jax.random.normal(kb, (NUM_CLASSES,), dtype=jnp.float32) * 0.01

    probs = emotion_model_forward(x, w, b)
    probs = jax.block_until_ready(probs)

    # Sanity checks: shape (B, K), rows sum to 1 (softmax over dim=1).
    assert probs.shape == (B, NUM_CLASSES)
    row_sums = jnp.sum(probs, axis=1)
    assert bool(jnp.all(jnp.abs(row_sums - 1.0) < 1e-5))

    # Cross-check against a pure-JAX f32 reference (pool + linear + softmax).
    # Tolerance covers the bf16 activation read (accumulation is f32).
    pooled_ref = jnp.mean(x.reshape(B, C, H * W), axis=-1)
    logits_ref = pooled_ref @ w + b
    probs_ref = jax.nn.softmax(logits_ref, axis=1)
    assert bool(jnp.all(jnp.abs(probs - probs_ref) < 2e-3))

    print("KERNEL_OK")
</pallas_src>

<mosaic_0001>
module attributes {stable_mosaic.version = 11 : i64} {
  func.func @emotion_kernel(%arg0: i32, %arg1: memref<2x4x256xbf16, #tpu.memory_space<vmem>>, %arg2: memref<4x8xf32, #tpu.memory_space<vmem>>, %arg3: memref<1x8xf32, #tpu.memory_space<vmem>>, %arg4: memref<2x8xf32, #tpu.memory_space<vmem>>) attributes {dimension_semantics = [#tpu.dimension_semantics<parallel>], iteration_bounds = array<i64: 1>, scalar_prefetch = 0 : i64, scratch_operands = 0 : i64, tpu.core_type = #tpu.core_type<tc>, window_params = [{transform_indices = @transform_0, window_bounds = array<i64: 2, 4, 256>}, {pipeline_mode = #tpu.pipeline_mode<synchronous>, transform_indices = @transform_1, window_bounds = array<i64: 4, 8>}, {pipeline_mode = #tpu.pipeline_mode<synchronous>, transform_indices = @transform_2, window_bounds = array<i64: 1, 8>}, {transform_indices = @transform_3, window_bounds = array<i64: 2, 8>}]} {
    %c0 = arith.constant 0 : index
    %c0_0 = arith.constant 0 : index
    %c0_1 = arith.constant 0 : index
    %0 = vector.load %arg1[%c0, %c0_0, %c0_1] : memref<2x4x256xbf16, #tpu.memory_space<vmem>>, vector<2x4x256xbf16>
    %1 = arith.extf %0 : vector<2x4x256xbf16> to vector<2x4x256xf32>
    %cst = arith.constant dense<0.000000e+00> : vector<2x4xf32>
    %2 = vector.multi_reduction <add>, %1, %cst [2] : vector<2x4x256xf32> to vector<2x4xf32>
    %c0_2 = arith.constant 0 : index
    %c0_3 = arith.constant 0 : index
    %3 = vector.load %arg2[%c0_2, %c0_3] : memref<4x8xf32, #tpu.memory_space<vmem>>, vector<4x8xf32>
    %cst_4 = arith.constant dense<0.000000e+00> : vector<2x8xf32>
    %4 = tpu.matmul %2, %3, %cst_4 {dimension_numbers = #tpu.dot_dimension_numbers<[1], [0], [0], [1], [0, 0, 1, 1], [], []>} : vector<2x4xf32>, vector<4x8xf32>, vector<2x8xf32> -> vector<2x8xf32>
    %c0_5 = arith.constant 0 : index
    %c0_6 = arith.constant 0 : index
    %5 = vector.load %arg3[%c0_5, %c0_6] : memref<1x8xf32, #tpu.memory_space<vmem>>, vector<1x8xf32>
    %6 = vector.broadcast %5 : vector<1x8xf32> to vector<2x8xf32>
    %7 = arith.addf %4, %6 : vector<2x8xf32>
    %cst_7 = arith.constant dense<0xFF800000> : vector<2xf32>
    %8 = vector.multi_reduction <maximumf>, %7, %cst_7 [1] : vector<2x8xf32> to vector<2xf32>
    %9 = vector.shape_cast %8 : vector<2xf32> to vector<2x1xf32>
    %10 = vector.broadcast %9 : vector<2x1xf32> to vector<2x8xf32>
    %11 = arith.subf %7, %10 : vector<2x8xf32>
    %12 = math.exp %11 : vector<2x8xf32>
    %cst_8 = arith.constant dense<0.000000e+00> : vector<2xf32>
    %13 = vector.multi_reduction <add>, %12, %cst_8 [1] : vector<2x8xf32> to vector<2xf32>
    %14 = vector.shape_cast %13 : vector<2xf32> to vector<2x1xf32>
    %15 = vector.broadcast %14 : vector<2x1xf32> to vector<2x8xf32>
    %16 = arith.divf %12, %15 : vector<2x8xf32>
    %c0_9 = arith.constant 0 : index
    %c0_10 = arith.constant 0 : index
    %17 = vector.load %arg4[%c0_9, %c0_10] : memref<2x8xf32, #tpu.memory_space<vmem>>, vector<2x8xf32>
    tpu.vector_store %arg4[%c0_9, %c0_10], %16 {strides = array<i32>} : memref<2x8xf32, #tpu.memory_space<vmem>>, vector<2x8xf32>,
    return
  }
  func.func @transform_0(%arg0: i32) -> (i32, i32, i32) {
    %c0_i32 = arith.constant 0 : i32
    %c0_i32_0 = arith.constant 0 : i32
    %c0_i32_1 = arith.constant 0 : i32
    return %arg0, %c0_i32, %c0_i32_0 : i32, i32, i32
  }
  func.func @transform_1(%arg0: i32) -> (i32, i32) {
    %c0_i32 = arith.constant 0 : i32
    %c0_i32_0 = arith.constant 0 : i32
    %c0_i32_1 = arith.constant 0 : i32
    return %c0_i32, %c0_i32_0 : i32, i32
  }
  func.func @transform_2(%arg0: i32) -> (i32, i32) {
    %c0_i32 = arith.constant 0 : i32
    %c0_i32_0 = arith.constant 0 : i32
    %c0_i32_1 = arith.constant 0 : i32
    return %c0_i32, %c0_i32_0 : i32, i32
  }
  func.func @transform_3(%arg0: i32) -> (i32, i32) {
    %c0_i32 = arith.constant 0 : i32
    %c0_i32_0 = arith.constant 0 : i32
    return %arg0, %c0_i32 : i32, i32
  }
}

</mosaic_0001>

<llo_original>
// kernel: tpu_custom_call.1
$region0: #{tpu_custom_call.1}
  #allocation0 [shape = 'u32[]', space=smem, size = 0x4, offset = 0x4, fixed_abs, tag = 'smem constant byte address 0x4 - core index']
  #allocation1 [shape = 'u32[144,128]{1,0:T(1,128)}', space=vmem, size = 0x12000, scoped, tag = 'internal scratch']
  %s0 = inlined_call_operand.hbm [shape: bf16[2,4,256], index: 0, kind: input, shape index: {}]
  %s1 = inlined_call_operand.hbm [shape: f32[4,8], index: 1, kind: input, shape index: {}]
  %s2 = inlined_call_operand.vmem [shape: f32[1,8], index: 2, kind: input, shape index: {}]
  %s3 = inlined_call_operand.hbm [shape: f32[2,8], index: 3, kind: output, shape index: {}]
  %s4 = sld [smem:[#allocation0]]
  $region30: #{tpu_custom_call.1} parent=0
    _
  %s6 = ssub.s32 1, %s4
  %s7 = scalar_select 0, %s6, %s4
  $region1: #{tpu_custom_call.1} parent=0
    #allocation2 [shape = 'u8[4096]{0}', space=vmem, size = 0x1000, scoped, tag = 'input window, operand 0, single buffered']
    #allocation3 [shape = 's32[1]{0}', space=sflag, size = 0x4, scoped, tag = 'scoped memory for tpu_custom_call.1']
    #allocation4 [shape = 's32[1]{0}', space=sflag, size = 0x4, scoped, tag = 'scoped memory for tpu_custom_call.1']
    #allocation5 [shape = 'u8[2048]{0}', space=vmem, size = 0x800, scoped, tag = 'input window, operand 1, single buffered']
    #allocation6 [shape = 's32[1]{0}', space=sflag, size = 0x4, scoped, tag = 'scoped memory for tpu_custom_call.1']
    #allocation7 [shape = 'u8[1024]{0}', space=vmem, size = 0x400, scoped, tag = 'output window, operand 0, single buffered']
    %8 = vsyncpa [#allocation3], 0
    %9 = vsyncpa [#allocation6], 0
    %10 = vsyncpa [#allocation4], 0
    // Predicated region
    $region2: #{tpu_custom_call.1} parent=1 // pred_check
      _
    $region3: #{tpu_custom_call.1} parent=1 // pred_check_branch
      %12 = sbr.rel (0) target = $region5
    $region4: #{tpu_custom_call.1} parent=1 // pred_region
      %s14 = ssub.s32 128, 128
      %15 = vsyncadd [#allocation3], %s14
      %s16 = sshll.u32 [#allocation2], 4
      %s17 = int_to_ptr.vmem [resolvable:$true] %s16
      %22 = dma.hbm_to_vmem [thread:$0]  %s0, 128, %s17, [#allocation3], 64, 64, 4
    $region5: #{tpu_custom_call.1} parent=1 // pred_fallthru
      _
    // Predicated region
    $region6: #{tpu_custom_call.1} parent=1 // pred_check
      _
    $region7: #{tpu_custom_call.1} parent=1 // pred_check_branch
      %24 = sbr.rel (0) target = $region9
    $region8: #{tpu_custom_call.1} parent=1 // pred_region
      %s26 = ssub.s32 64, 64
      %27 = vsyncadd [#allocation6], %s26
      %s29 = sshll.u32 [#allocation5], 4
      %s30 = int_to_ptr.vmem [resolvable:$true] %s29
      %32 = dma.hbm_to_vmem [thread:$0]  %s1, 64, %s30, [#allocation6]
    $region9: #{tpu_custom_call.1} parent=1 // pred_fallthru
      _
    // Predicated region
    $region10: #{tpu_custom_call.1} parent=1 // pred_check
      _
    $region11: #{tpu_custom_call.1} parent=1 // pred_check_branch
      %34 = sbr.rel (0) target = $region13
    $region12: #{tpu_custom_call.1} parent=1 // pred_region
      _
    $region13: #{tpu_custom_call.1} parent=1 // pred_fallthru
      _
    // Predicated region
    $region14: #{tpu_custom_call.1} parent=1 // pred_check
      _
    $region15: #{tpu_custom_call.1} parent=1 // pred_check_branch
      %36 = sbr.rel (0) target = $region17
    $region16: #{tpu_custom_call.1} parent=1 // pred_region
      %37 = dma.done [#allocation3], 128
    $region17: #{tpu_custom_call.1} parent=1 // pred_fallthru
      _
    // Predicated region
    $region18: #{tpu_custom_call.1} parent=1 // pred_check
      _
    $region19: #{tpu_custom_call.1} parent=1 // pred_check_branch
      %39 = sbr.rel (0) target = $region21
    $region20: #{tpu_custom_call.1} parent=1 // pred_region
      %40 = dma.done [#allocation6], 64
    $region21: #{tpu_custom_call.1} parent=1 // pred_fallthru
      _
    %v41 = vld [vmem:[#allocation2] sm:$0xf]
    %v42 = vld [vmem:[#allocation2 + $0x4] sm:$0xf]
    %v43 = vunpack.c.l.bf16 %v41
    %v44 = vunpack.c.l.bf16 %v42
    %v47 = vcombine.high %v43, %v43
    %v48 = vcombine.high %v44, %v44
    %vm51 = vcmask 1043456
    %v52 = vsel %vm51, %v43, 0.0
    %v53 = vsel %vm51, %v47, 0.0
    %v54 = vadd.f32 %v52, %v53
    %55 = vadd.xlane.f32.xlu0 %v54
    %v56 = vpop.xlane.xlu0 %55
    %v57 = vsel %vm51, %v44, 0.0
    %v58 = vsel %vm51, %v48, 0.0
    %v59 = vadd.f32 %v57, %v58
    %60 = vadd.xlane.f32.xlu0 %v59
    %v61 = vpop.xlane.xlu0 %60
    %v62 = vld [vmem:[#allocation5] sm:$0xf]
    %v63 = vld [vmem:[%s2] sm:$0x1]
    %v65 = vlaneseq
    %v66 = vshrl.u32 %v65, 7
    %v67 = vsub.s32 0, %v66
    %v68 = vrot.slane %v63, %v67
    %v72 = vlaneseq
    %v73 = vand.u32 %v72, 127
    %v74 = vlaneseq
    %v75 = vshrl.u32 %v74, 7
    %v76 = vsub.s32 %v73, %v75
    %v77 = vrot.slane %v56, %v76
    %v78 = vlaneseq
    %v79 = vshrl.u32 %v78, 7
    %v80 = vsub.s32 %v73, %v79
    %v81 = vrot.slane %v61, %v80
    %vm82 = vcmask 1041409
    %v83 = vsel %vm82, %v81, %v77
    %vm84 = vcmask 31744
    %v85 = vsel %vm84, %v83, 0
    %v88 = vsel %vm51, %v62, 0
    %90 = vmatprep.subr.mxu0 0.0
    %91 = vmatpush1.msra.mxu0 %v88
    %92 = vmatprep.subr.mxu0 0.0
    %93 = vmatpush1.msra.mxu0 0.0
    %94 = vmatprep.subr.mxu0 0.0
    %95 = vmatpush1.msra.mxu0 0.0
    %96 = vmatprep.subr.mxu0 0.0
    %97 = vmatpush1.msra.mxu0 0.0
    %98 = vmatprep.subr.mxu0 0.0
    %99 = vmatpush1.msra.mxu0 0.0
    %100 = vmatprep.subr.mxu0 0.0
    %101 = vmatpush1.msra.mxu0 0.0
    %102 = vmatprep.subr.mxu0 0.0
    %103 = vmatpush1.msra.mxu0 0.0
    %104 = vmatprep.subr.mxu0 0.0
    %105 = vmatpush1.msra.mxu0 0.0
    %106 = vmatprep.subr.mxu0 0.0
    %107 = vmatpush1.msra.mxu0 0.0
    %108 = vmatprep.subr.mxu0 0.0
    %109 = vmatpush1.msra.mxu0 0.0
    %110 = vmatprep.subr.mxu0 0.0
    %111 = vmatpush1.msra.mxu0 0.0
    %112 = vmatprep.subr.mxu0 0.0
    %113 = vmatpush1.msra.mxu0 0.0
    %114 = vmatprep.subr.mxu0 0.0
    %115 = vmatpush1.msra.mxu0 0.0
    %116 = vmatprep.subr.mxu0 0.0
    %117 = vmatpush1.msra.mxu0 0.0
    %118 = vmatprep.subr.mxu0 0.0
    %119 = vmatpush1.msra.mxu0 0.0
    %120 = vmatprep.subr.mxu0 0.0
    %121 = vmatpush1.msra.mxu0 0.0
    %122 = vmatprep.subr.mxu0 0.0
    %123 = vmatpush1.msra.mxu0 0.0
    %124 = vmatprep.subr.mxu0 0.0
    %125 = vmatpush1.msra.mxu0 0.0
    %126 = vmatprep.subr.mxu0 0.0
    %127 = vmatpush1.msra.mxu0 0.0
    %128 = vmatprep.subr.mxu0 0.0
    %129 = vmatpush1.msra.mxu0 0.0
    %130 = vmatprep.subr.mxu0 0.0
    %131 = vmatpush1.msra.mxu0 0.0
    %132 = vmatprep.subr.mxu0 0.0
    %133 = vmatpush1.msra.mxu0 0.0
    %134 = vmatprep.subr.mxu0 0.0
    %135 = vmatpush1.msra.mxu0 0.0
    %136 = vmatprep.subr.mxu0 0.0
    %137 = vmatpush1.msra.mxu0 0.0
    %138 = vmatprep.subr.mxu0 0.0
    %139 = vmatpush1.msra.mxu0 0.0
    %140 = vmatprep.subr.mxu0 0.0
    %141 = vmatpush1.msra.mxu0 0.0
    %142 = vmatprep.subr.mxu0 0.0
    %143 = vmatpush1.msra.mxu0 0.0
    %144 = vmatprep.subr.mxu0 0.0
    %145 = vmatpush1.msra.mxu0 0.0
    %146 = vmatprep.subr.mxu0 0.0
    %147 = vmatpush1.msra.mxu0 0.0
    %148 = vmatprep.subr.mxu0 0.0
    %149 = vmatpush1.msra.mxu0 0.0
    %150 = vmatprep.subr.mxu0 0.0
    %151 = vmatpush1.msra.mxu0 0.0
    %152 = vmatprep.subr.mxu0 0.0
    %153 = vmatpush1.msra.mxu0 0.0
    %154 = vmatprep.mubr.f32.mxu0 0.0
    %155 = vmatmul.mubr.f32.gmra.mrb[0].mxu0 %v85
    %v156 = vpop.f32.mrb[0].mxu0
    %v157 = vadd.f32 %v68, %v156
    %v158 = vpop.f32.mrb[0].mxu0
    %159 = vdwg.mxu0
    %vm160 = vcmask 58368
    %v161 = vsel %vm160, %v157, -inf
    %162 = vmax.xlane.f32.xlu0 %v161
    %v163 = vpop.xlane.xlu0 %162
    %v164 = vsub.f32 %v157, %v163
    %v165 = vmul.f32 %v164, 1.442695
    %v166 = vpow.pop %v165
    %v167 = vsel %vm160, %v166, 0.0
    %168 = vadd.xlane.f32.xlu0 %v167
    %v169 = vpop.xlane.xlu0 %168
    %v170 = vrcp.pop %v169
    %v171 = vmul.f32 %v166, %v170
    %172 = vst.msk [vmem:[#allocation7] sm:$0x3] %vm160, %v171
    // Predicated region
    $region22: #{tpu_custom_call.1} parent=1 // pred_check
      _
    $region23: #{tpu_custom_call.1} parent=1 // pred_check_branch
      %174 = sbr.rel (0) target = $region25
    $region24: #{tpu_custom_call.1} parent=1 // pred_region
      %s176 = ssub.s32 32, 32
      %177 = vsyncadd [#allocation4], %s176
      %s179 = sshll.u32 [#allocation7], 4
      %s180 = int_to_ptr.vmem [resolvable:$true] %s179
      %182 = dma.vmem_to_hbm [thread:$0]  %s180, 32, %s3, [#allocation4]
    $region25: #{tpu_custom_call.1} parent=1 // pred_fallthru
      _
    // Predicated region
    $region26: #{tpu_custom_call.1} parent=1 // pred_check
      _
    $region27: #{tpu_custom_call.1} parent=1 // pred_check_branch
      %184 = sbr.rel (0) target = $region29
    $region28: #{tpu_custom_call.1} parent=1 // pred_region
      %185 = dma.done [#allocation4], 32
    $region29: #{tpu_custom_call.1} parent=1 // pred_fallthru
      _
    %186 = vsyncpa [#allocation3], 1
    %187 = vsyncpa [#allocation6], 1
    %188 = vsyncpa [#allocation4], 1

</llo_original>
